<compile_context>
chip_gen: v7x
topology: tpu7x:2x2x1
jax: 0.10.0
libtpu: 0.0.40
codegen_flags: <defaults>
</compile_context>

<pallas_src>
import jax
import jax.numpy as jnp
from jax.experimental import pallas as pl
from jax.experimental.pallas import tpu as pltpu

# per-input-tile byte targets (pipeline double-buffers each operand)
_MEAN_TILE_BYTES = 2 << 20   # mean path: 2 inputs  -> ~8 MiB VMEM
_KEEP_TILE_BYTES = 1 << 20   # elementwise path: 2 in + 1 out -> ~6 MiB VMEM


def _sq_diff_kernel(p_ref, t_ref, o_ref):
    # elementwise (pred - target)^2 over one (bn, sub, lanes) block
    d = p_ref[...].astype(jnp.float32) - t_ref[...].astype(jnp.float32)
    o_ref[...] = (d * d).astype(o_ref.dtype)


def _partial_sumsq_kernel(p_ref, t_ref, o_ref):
    # per-block partial sum of squared differences, kept vreg-shaped:
    # reduce only over the leading (non-tiled) block axis -> pure VPU adds.
    # The final cross-lane/sublane reduce happens once, in the wrapper.
    d = p_ref[...].astype(jnp.float32) - t_ref[...].astype(jnp.float32)
    o_ref[...] = jnp.sum(d * d, axis=0, keepdims=True)


def _choose_layout(n, itemsize, sub, target_tile_bytes):
    """Pick (padded_total, lanes, rows, block_rows) for a (rows, sub, lanes) slab."""
    min_tile = sub * 128
    total = -(-n // min_tile) * min_tile          # pad only if not tile-aligned
    # widest lane dim that still yields whole (sub, lanes) tiles
    lanes = 128
    for cand in (2048, 1024, 512, 256):
        if total % (sub * cand) == 0:
            lanes = cand
            break
    rows = total // (sub * lanes)
    row_bytes = sub * lanes * itemsize
    bn_cap = max(1, target_tile_bytes // row_bytes)
    bn = 1
    for b in range(min(rows, bn_cap), 0, -1):     # largest divisor <= cap
        if rows % b == 0:
            bn = b
            break
    return total, lanes, rows, bn


def custom_mse_loss(pred, target, keep_batch_dim=False):
    """Pallas equivalent of CustomMSELoss.forward.

    keep_batch_dim=False -> scalar mean of squared errors (reduction='mean')
    keep_batch_dim=True  -> elementwise squared errors    (reduction='none')
    """
    assert pred.shape == target.shape
    orig_shape = pred.shape
    n = pred.size
    itemsize = jnp.dtype(pred.dtype).itemsize
    sub = {4: 8, 2: 16, 1: 32}.get(itemsize, 8)   # sublane-aligned per dtype
    tile_bytes = _KEEP_TILE_BYTES if keep_batch_dim else _MEAN_TILE_BYTES
    total, lanes, rows, bn = _choose_layout(n, itemsize, sub, tile_bytes)

    flat_p = pred.reshape(-1)
    flat_t = target.reshape(-1)
    if total != n:
        # Rare fallback when n is not (sub*128)-aligned; zero padding
        # contributes 0 to the sum and the mean divides by the original n.
        # TODO(synk): avoid this copy by scalar-prefetching n and masking the
        #             tail block in-kernel with broadcasted_iota.
        flat_p = jnp.pad(flat_p, (0, total - n))
        flat_t = jnp.pad(flat_t, (0, total - n))
    p3 = flat_p.reshape(rows, sub, lanes)          # free reshape when unpadded
    t3 = flat_t.reshape(rows, sub, lanes)

    num_blocks = rows // bn
    blk = (bn, sub, lanes)
    idx = lambda i: (i, 0, 0)

    if keep_batch_dim:
        out = pl.pallas_call(
            _sq_diff_kernel,
            out_shape=jax.ShapeDtypeStruct((rows, sub, lanes), pred.dtype),
            grid=(num_blocks,),
            in_specs=[pl.BlockSpec(blk, idx), pl.BlockSpec(blk, idx)],
            out_specs=pl.BlockSpec(blk, idx),
            compiler_params=pltpu.CompilerParams(
                dimension_semantics=("parallel",)),
        )(p3, t3)
        flat_out = out.reshape(-1)
        if total != n:
            flat_out = flat_out[:n]
        return flat_out.reshape(orig_shape)
    else:
        # per-block partial sums (tiny output), parallel over the grid so
        # both TensorCores participate on v7x; final reduce in plain JAX.
        partials = pl.pallas_call(
            _partial_sumsq_kernel,
            out_shape=jax.ShapeDtypeStruct((num_blocks, sub, lanes),
                                           jnp.float32),
            grid=(num_blocks,),
            in_specs=[pl.BlockSpec(blk, idx), pl.BlockSpec(blk, idx)],
            out_specs=pl.BlockSpec((1, sub, lanes), idx),
            compiler_params=pltpu.CompilerParams(
                dimension_semantics=("parallel",)),
        )(p3, t3)
        total_sq = jnp.sum(partials)
        return (total_sq / jnp.float32(n)).astype(pred.dtype)


if __name__ == "__main__":
    key = jax.random.PRNGKey(0)
    k1, k2 = jax.random.split(key)
    shape = (2, 4, 16, 16)  # small batch=2, channels=4, spatial=16
    pred = jax.random.normal(k1, shape, dtype=jnp.float32)
    target = jax.random.normal(k2, shape, dtype=jnp.float32)

    # mean-reduced loss (default path)
    loss = custom_mse_loss(pred, target, keep_batch_dim=False)
    loss = jax.block_until_ready(loss)

    # elementwise loss (keep_batch_dim=True path)
    elem = custom_mse_loss(pred, target, keep_batch_dim=True)
    elem = jax.block_until_ready(elem)

    # verify against plain-JAX reference
    ref_elem = (pred - target) ** 2
    ref_loss = jnp.mean(ref_elem)
    assert elem.shape == shape
    assert jnp.allclose(elem, ref_elem, rtol=1e-5, atol=1e-5)
    assert jnp.allclose(loss, ref_loss, rtol=1e-5, atol=1e-5)

    print("KERNEL_OK")
</pallas_src>

<mosaic_0001>
module attributes {stable_mosaic.version = 11 : i64} {
  func.func @_partial_sumsq_kernel(%arg0: i32, %arg1: memref<1x8x256xf32, #tpu.memory_space<vmem>>, %arg2: memref<1x8x256xf32, #tpu.memory_space<vmem>>, %arg3: memref<1x8x256xf32, #tpu.memory_space<vmem>>) attributes {dimension_semantics = [#tpu.dimension_semantics<parallel>], iteration_bounds = array<i64: 1>, scalar_prefetch = 0 : i64, scratch_operands = 0 : i64, tpu.core_type = #tpu.core_type<tc>, window_params = [{transform_indices = @transform_0, window_bounds = array<i64: 1, 8, 256>}, {transform_indices = @transform_1, window_bounds = array<i64: 1, 8, 256>}, {transform_indices = @transform_2, window_bounds = array<i64: 1, 8, 256>}]} {
    %c0 = arith.constant 0 : index
    %c0_0 = arith.constant 0 : index
    %c0_1 = arith.constant 0 : index
    %0 = vector.load %arg1[%c0, %c0_0, %c0_1] : memref<1x8x256xf32, #tpu.memory_space<vmem>>, vector<1x8x256xf32>
    %c0_2 = arith.constant 0 : index
    %c0_3 = arith.constant 0 : index
    %c0_4 = arith.constant 0 : index
    %1 = vector.load %arg2[%c0_2, %c0_3, %c0_4] : memref<1x8x256xf32, #tpu.memory_space<vmem>>, vector<1x8x256xf32>
    %2 = arith.subf %0, %1 : vector<1x8x256xf32>
    %3 = arith.mulf %2, %2 : vector<1x8x256xf32>
    %cst = arith.constant dense<0.000000e+00> : vector<8x256xf32>
    %4 = vector.multi_reduction <add>, %3, %cst [0] : vector<1x8x256xf32> to vector<8x256xf32>
    %5 = vector.shape_cast %4 : vector<8x256xf32> to vector<1x8x256xf32>
    %c0_5 = arith.constant 0 : index
    %c0_6 = arith.constant 0 : index
    %c0_7 = arith.constant 0 : index
    %6 = vector.load %arg3[%c0_5, %c0_6, %c0_7] : memref<1x8x256xf32, #tpu.memory_space<vmem>>, vector<1x8x256xf32>
    tpu.vector_store %arg3[%c0_5, %c0_6, %c0_7], %5 {strides = array<i32>} : memref<1x8x256xf32, #tpu.memory_space<vmem>>, vector<1x8x256xf32>,
    return
  }
  func.func @transform_0(%arg0: i32) -> (i32, i32, i32) {
    %c0_i32 = arith.constant 0 : i32
    %c0_i32_0 = arith.constant 0 : i32
    %c0_i32_1 = arith.constant 0 : i32
    return %arg0, %c0_i32, %c0_i32_0 : i32, i32, i32
  }
  func.func @transform_1(%arg0: i32) -> (i32, i32, i32) {
    %c0_i32 = arith.constant 0 : i32
    %c0_i32_0 = arith.constant 0 : i32
    %c0_i32_1 = arith.constant 0 : i32
    return %arg0, %c0_i32, %c0_i32_0 : i32, i32, i32
  }
  func.func @transform_2(%arg0: i32) -> (i32, i32, i32) {
    %c0_i32 = arith.constant 0 : i32
    %c0_i32_0 = arith.constant 0 : i32
    %c0_i32_1 = arith.constant 0 : i32
    return %arg0, %c0_i32, %c0_i32_0 : i32, i32, i32
  }
}

</mosaic_0001>

<llo_original>
// kernel: tpu_custom_call.1
$region0: #{tpu_custom_call.1}
  #allocation0 [shape = 'u32[]', space=smem, size = 0x4, offset = 0x4, fixed_abs, tag = 'smem constant byte address 0x4 - core index']
  #allocation1 [shape = 'u32[144,128]{1,0:T(1,128)}', space=vmem, size = 0x12000, scoped, tag = 'internal scratch']
  %s0 = inlined_call_operand.hbm [shape: f32[1,8,256], index: 0, kind: input, shape index: {}]
  %s1 = inlined_call_operand.hbm [shape: f32[1,8,256], index: 1, kind: input, shape index: {}]
  %s2 = inlined_call_operand.hbm [shape: f32[1,8,256], index: 2, kind: output, shape index: {}]
  %s3 = sld [smem:[#allocation0]]
  $region26: #{tpu_custom_call.1} parent=0
    _
  %s5 = ssub.s32 1, %s3
  %s6 = scalar_select 0, %s5, %s3
  $region1: #{tpu_custom_call.1} parent=0
    #allocation2 [shape = 'u8[8192]{0}', space=vmem, size = 0x2000, scoped, tag = 'input window, operand 0, single buffered']
    #allocation3 [shape = 's32[1]{0}', space=sflag, size = 0x4, scoped, tag = 'scoped memory for tpu_custom_call.1']
    #allocation4 [shape = 's32[1]{0}', space=sflag, size = 0x4, scoped, tag = 'scoped memory for tpu_custom_call.1']
    #allocation5 [shape = 'u8[8192]{0}', space=vmem, size = 0x2000, scoped, tag = 'input window, operand 1, single buffered']
    #allocation6 [shape = 's32[1]{0}', space=sflag, size = 0x4, scoped, tag = 'scoped memory for tpu_custom_call.1']
    #allocation7 [shape = 'u8[8192]{0}', space=vmem, size = 0x2000, scoped, tag = 'output window, operand 0, single buffered']
    %7 = vsyncpa [#allocation3], 0
    %8 = vsyncpa [#allocation6], 0
    %9 = vsyncpa [#allocation4], 0
    // Predicated region
    $region2: #{tpu_custom_call.1} parent=1 // pred_check
      _
    $region3: #{tpu_custom_call.1} parent=1 // pred_check_branch
      %11 = sbr.rel (0) target = $region5
    $region4: #{tpu_custom_call.1} parent=1 // pred_region
      %s13 = ssub.s32 256, 256
      %14 = vsyncadd [#allocation3], %s13
      %s16 = sshll.u32 [#allocation2], 4
      %s17 = int_to_ptr.vmem [resolvable:$true] %s16
      %19 = dma.hbm_to_vmem [thread:$0]  %s0, 256, %s17, [#allocation3]
    $region5: #{tpu_custom_call.1} parent=1 // pred_fallthru
      _
    // Predicated region
    $region6: #{tpu_custom_call.1} parent=1 // pred_check
      _
    $region7: #{tpu_custom_call.1} parent=1 // pred_check_branch
      %21 = sbr.rel (0) target = $region9
    $region8: #{tpu_custom_call.1} parent=1 // pred_region
      %s23 = ssub.s32 256, 256
      %24 = vsyncadd [#allocation6], %s23
      %s26 = sshll.u32 [#allocation5], 4
      %s27 = int_to_ptr.vmem [resolvable:$true] %s26
      %29 = dma.hbm_to_vmem [thread:$0]  %s1, 256, %s27, [#allocation6]
    $region9: #{tpu_custom_call.1} parent=1 // pred_fallthru
      _
    // Predicated region
    $region10: #{tpu_custom_call.1} parent=1 // pred_check
      _
    $region11: #{tpu_custom_call.1} parent=1 // pred_check_branch
      %31 = sbr.rel (0) target = $region13
    $region12: #{tpu_custom_call.1} parent=1 // pred_region
      %32 = dma.done [#allocation3], 256
    $region13: #{tpu_custom_call.1} parent=1 // pred_fallthru
      _
    // Predicated region
    $region14: #{tpu_custom_call.1} parent=1 // pred_check
      _
    $region15: #{tpu_custom_call.1} parent=1 // pred_check_branch
      %34 = sbr.rel (0) target = $region17
    $region16: #{tpu_custom_call.1} parent=1 // pred_region
      %35 = dma.done [#allocation6], 256
    $region17: #{tpu_custom_call.1} parent=1 // pred_fallthru
      _
    %v36 = vld [vmem:[#allocation2] sm:$0xff]
    %v37 = vld [vmem:[#allocation2 + $0x8] sm:$0xff]
    %v38 = vld [vmem:[#allocation5] sm:$0xff]
    %v39 = vld [vmem:[#allocation5 + $0x8] sm:$0xff]
    %v40 = vsub.f32 %v36, %v38
    %v41 = vsub.f32 %v37, %v39
    %v42 = vmul.f32 %v40, %v40
    %v43 = vmul.f32 %v41, %v41
    %v44 = vadd.f32 %v42, 0.0
    %v45 = vadd.f32 %v43, 0.0
    %46 = vst [vmem:[#allocation7] sm:$0xff] %v44
    %47 = vst [vmem:[#allocation7 + $0x8] sm:$0xff] %v45
    // Predicated region
    $region18: #{tpu_custom_call.1} parent=1 // pred_check
      _
    $region19: #{tpu_custom_call.1} parent=1 // pred_check_branch
      %49 = sbr.rel (0) target = $region21
    $region20: #{tpu_custom_call.1} parent=1 // pred_region
      %s51 = ssub.s32 256, 256
      %52 = vsyncadd [#allocation4], %s51
      %s54 = sshll.u32 [#allocation7], 4
      %s55 = int_to_ptr.vmem [resolvable:$true] %s54
      %57 = dma.vmem_to_hbm [thread:$0]  %s55, 256, %s2, [#allocation4]
    $region21: #{tpu_custom_call.1} parent=1 // pred_fallthru
      _
    // Predicated region
    $region22: #{tpu_custom_call.1} parent=1 // pred_check
      _
    $region23: #{tpu_custom_call.1} parent=1 // pred_check_branch
      %59 = sbr.rel (0) target = $region25
    $region24: #{tpu_custom_call.1} parent=1 // pred_region
      %60 = dma.done [#allocation4], 256
    $region25: #{tpu_custom_call.1} parent=1 // pred_fallthru
      _
    %61 = vsyncpa [#allocation3], 1
    %62 = vsyncpa [#allocation6], 1
    %63 = vsyncpa [#allocation4], 1

</llo_original>
